<compile_context>
chip_gen: v7x
topology: tpu7x:2x2x1
jax: 0.10.0
libtpu: 0.0.40
codegen_flags: <defaults>
</compile_context>

<pallas_src>
import functools

import jax
import jax.numpy as jnp
import numpy as np
from jax.experimental import pallas as pl
from jax.experimental.pallas import tpu as pltpu

# ---- small, module-consistent config ----
BATCH = 2
SEQ_LEN = 16
PRED_LEN = 8
N_VARS = 4
DECOMP_KSIZE = 5   # odd, like the reference series_decomp


def _moving_average_matrix(seq_len, ksize, dtype):
    """M[t, s] = weight of x[s] in the edge-replicated AvgPool1d(k, stride=1) at step t."""
    pad = (ksize - 1) // 2
    m = np.zeros((seq_len, seq_len), np.float64)
    for t in range(seq_len):
        for j in range(-pad, pad + 1):
            m[t, min(max(t + j, 0), seq_len - 1)] += 1.0 / ksize
    return jnp.asarray(m, dtype=dtype)


def _lane_tile(n, max_tile=512):
    """Full extent when small; otherwise a 128-aligned tile (partial last tile is fine)."""
    return n if n <= max_tile else max_tile


# ------------------------- shared_proj=True -------------------------

def dlinear_shared_kernel(w_ref, b_ref, x_ref, o_ref):
    # w_ref: (P, S)       folded weight (resident across the grid)
    # b_ref: (P, 1)       folded bias   (resident across the grid)
    # x_ref: (S, n_tile)  time-major activations, batch*vars on the lane axis
    # o_ref: (P, n_tile)  lane-dense output tile
    o_ref[...] = (
        jnp.dot(w_ref[...], x_ref[...], preferred_element_type=jnp.float32)
        + b_ref[...]
    ).astype(o_ref.dtype)


@functools.partial(jax.jit, static_argnames=("ksize",))
def dlinear_forward_shared(x, ws, bs, wt, bt, *, ksize=DECOMP_KSIZE):
    """x: [B,S,V]; ws/wt: [P,S] (nn.Linear layout); bs/bt: [P] -> out [B,P,V]."""
    B, S, V = x.shape
    P = ws.shape[0]

    # Algebraic fold of the seasonal-trend decomposition into a single linear layer.
    m_ma = _moving_average_matrix(S, ksize, jnp.float32)
    w_eff = (ws + jnp.dot(wt - ws, m_ma)).astype(x.dtype)        # (P, S)
    b_eff = (bs + bt).astype(jnp.float32).reshape(P, 1)          # (P, 1)

    # Fold batch into the lane / matmul-N dimension.
    x2 = jnp.transpose(x, (1, 0, 2)).reshape(S, B * V)           # (S, B*V)
    n = B * V
    n_tile = _lane_tile(n)

    out2 = pl.pallas_call(
        dlinear_shared_kernel,
        out_shape=jax.ShapeDtypeStruct((P, n), x.dtype),
        grid=(pl.cdiv(n, n_tile),),
        in_specs=[
            pl.BlockSpec((P, S), lambda i: (0, 0)),              # weight stays resident
            pl.BlockSpec((P, 1), lambda i: (0, 0)),              # bias stays resident
            pl.BlockSpec((S, n_tile), lambda i: (0, i)),         # activation lane tile
        ],
        out_specs=pl.BlockSpec((P, n_tile), lambda i: (0, i)),
        compiler_params=pltpu.CompilerParams(
            dimension_semantics=("parallel",)),
    )(w_eff, b_eff, x2)                                          # (P, B*V)

    return jnp.transpose(out2.reshape(P, B, V), (1, 0, 2))       # (B, P, V)


# ------------------------- shared_proj=False (one nn.Linear per variable) -------------------------

def dlinear_pervar_kernel(w_ref, b_ref, x_ref, o_ref):
    # w_ref: (1, P, S)   folded per-variable weight
    # b_ref: (1, P, 1)   folded per-variable bias
    # x_ref: (1, S, Bt)  this variable's time-major activations, batch on the lane axis
    # o_ref: (1, P, Bt)
    o_ref[0] = (
        jnp.dot(w_ref[0], x_ref[0], preferred_element_type=jnp.float32)
        + b_ref[0]
    ).astype(o_ref.dtype)


@functools.partial(jax.jit, static_argnames=("ksize",))
def dlinear_forward_pervar(x, ws, bs, wt, bt, *, ksize=DECOMP_KSIZE):
    """x: [B,S,V]; ws/wt: [V,P,S]; bs/bt: [V,P] -> out [B,P,V]."""
    B, S, V = x.shape
    P = ws.shape[1]

    m_ma = _moving_average_matrix(S, ksize, jnp.float32)
    w_eff = (ws + jnp.einsum("vps,st->vpt", wt - ws, m_ma)).astype(x.dtype)   # (V, P, S)
    b_eff = (bs + bt).astype(jnp.float32).reshape(V, P, 1)                    # (V, P, 1)

    xv = jnp.transpose(x, (2, 1, 0))                                          # (V, S, B)
    b_tile = _lane_tile(B)

    out = pl.pallas_call(
        dlinear_pervar_kernel,
        out_shape=jax.ShapeDtypeStruct((V, P, B), x.dtype),
        grid=(V, pl.cdiv(B, b_tile)),
        in_specs=[
            pl.BlockSpec((1, P, S), lambda v, j: (v, 0, 0)),
            pl.BlockSpec((1, P, 1), lambda v, j: (v, 0, 0)),
            pl.BlockSpec((1, S, b_tile), lambda v, j: (v, 0, j)),
        ],
        out_specs=pl.BlockSpec((1, P, b_tile), lambda v, j: (v, 0, j)),
        compiler_params=pltpu.CompilerParams(
            dimension_semantics=("parallel", "parallel")),
    )(w_eff, b_eff, xv)                                                       # (V, P, B)

    return jnp.transpose(out, (2, 1, 0))                                      # (B, P, V)


# ------------------------- pure-JAX references (PyTorch forward semantics) -------------------------

def _decomp_ref(x, ksize):
    pad = (ksize - 1) // 2
    xp = jnp.concatenate(
        [jnp.repeat(x[:, :1, :], pad, axis=1), x, jnp.repeat(x[:, -1:, :], pad, axis=1)],
        axis=1)
    trend = jnp.mean(
        jnp.stack([xp[:, j:j + x.shape[1], :] for j in range(ksize)], axis=0), axis=0)
    return x - trend, trend


def dlinear_reference_shared(x, ws, bs, wt, bt, ksize):
    seasonal, trend = _decomp_ref(x, ksize)
    s_out = jnp.einsum("bsv,ps->bpv", seasonal, ws) + bs[None, :, None]
    t_out = jnp.einsum("bsv,ps->bpv", trend, wt) + bt[None, :, None]
    return s_out + t_out


def dlinear_reference_pervar(x, ws, bs, wt, bt, ksize):
    seasonal, trend = _decomp_ref(x, ksize)
    s_out = jnp.einsum("bsv,vps->bpv", seasonal, ws) + jnp.swapaxes(bs, 0, 1)[None]
    t_out = jnp.einsum("bsv,vps->bpv", trend, wt) + jnp.swapaxes(bt, 0, 1)[None]
    return s_out + t_out


if __name__ == "__main__":
    key = jax.random.PRNGKey(0)
    keys = jax.random.split(key, 9)

    x = jax.random.normal(keys[0], (BATCH, SEQ_LEN, N_VARS), dtype=jnp.float32)
    bound = 1.0 / (SEQ_LEN ** 0.5)

    # shared_proj=True parameters (nn.Linear layout: weight [P,S], bias [P])
    ws = jax.random.uniform(keys[1], (PRED_LEN, SEQ_LEN), jnp.float32, -bound, bound)
    bs = jax.random.uniform(keys[2], (PRED_LEN,), jnp.float32, -bound, bound)
    wt = jax.random.uniform(keys[3], (PRED_LEN, SEQ_LEN), jnp.float32, -bound, bound)
    bt = jax.random.uniform(keys[4], (PRED_LEN,), jnp.float32, -bound, bound)

    out_s = jax.block_until_ready(
        dlinear_forward_shared(x, ws, bs, wt, bt, ksize=DECOMP_KSIZE))
    ref_s = dlinear_reference_shared(x, ws, bs, wt, bt, DECOMP_KSIZE)
    assert out_s.shape == (BATCH, PRED_LEN, N_VARS)
    assert jnp.allclose(out_s, ref_s, atol=1e-5, rtol=1e-5), "shared_proj mismatch vs reference"

    # shared_proj=False parameters (one nn.Linear per variable)
    wsv = jax.random.uniform(keys[5], (N_VARS, PRED_LEN, SEQ_LEN), jnp.float32, -bound, bound)
    bsv = jax.random.uniform(keys[6], (N_VARS, PRED_LEN), jnp.float32, -bound, bound)
    wtv = jax.random.uniform(keys[7], (N_VARS, PRED_LEN, SEQ_LEN), jnp.float32, -bound, bound)
    btv = jax.random.uniform(keys[8], (N_VARS, PRED_LEN), jnp.float32, -bound, bound)

    out_v = jax.block_until_ready(
        dlinear_forward_pervar(x, wsv, bsv, wtv, btv, ksize=DECOMP_KSIZE))
    ref_v = dlinear_reference_pervar(x, wsv, bsv, wtv, btv, DECOMP_KSIZE)
    assert out_v.shape == (BATCH, PRED_LEN, N_VARS)
    assert jnp.allclose(out_v, ref_v, atol=1e-5, rtol=1e-5), "per-variable mismatch vs reference"

    print("KERNEL_OK")
</pallas_src>

<mosaic_0001>
module attributes {stable_mosaic.version = 11 : i64} {
  func.func @dlinear_shared_kernel(%arg0: i32, %arg1: memref<8x16xf32, #tpu.memory_space<vmem>>, %arg2: memref<8x1xf32, #tpu.memory_space<vmem>>, %arg3: memref<16x8xf32, #tpu.memory_space<vmem>>, %arg4: memref<8x8xf32, #tpu.memory_space<vmem>>) attributes {dimension_semantics = [#tpu.dimension_semantics<parallel>], iteration_bounds = array<i64: 1>, scalar_prefetch = 0 : i64, scratch_operands = 0 : i64, tpu.core_type = #tpu.core_type<tc>, window_params = [{pipeline_mode = #tpu.pipeline_mode<synchronous>, transform_indices = @transform_0, window_bounds = array<i64: 8, 16>}, {pipeline_mode = #tpu.pipeline_mode<synchronous>, transform_indices = @transform_1, window_bounds = array<i64: 8, 1>}, {transform_indices = @transform_2, window_bounds = array<i64: 16, 8>}, {transform_indices = @transform_3, window_bounds = array<i64: 8, 8>}]} {
    %c0 = arith.constant 0 : index
    %c0_0 = arith.constant 0 : index
    %0 = vector.load %arg1[%c0, %c0_0] : memref<8x16xf32, #tpu.memory_space<vmem>>, vector<8x16xf32>
    %c0_1 = arith.constant 0 : index
    %c0_2 = arith.constant 0 : index
    %1 = vector.load %arg3[%c0_1, %c0_2] : memref<16x8xf32, #tpu.memory_space<vmem>>, vector<16x8xf32>
    %cst = arith.constant dense<0.000000e+00> : vector<8x8xf32>
    %2 = tpu.matmul %0, %1, %cst {dimension_numbers = #tpu.dot_dimension_numbers<[1], [0], [0], [1], [0, 0, 1, 1], [], []>} : vector<8x16xf32>, vector<16x8xf32>, vector<8x8xf32> -> vector<8x8xf32>
    %c0_3 = arith.constant 0 : index
    %c0_4 = arith.constant 0 : index
    %3 = vector.load %arg2[%c0_3, %c0_4] : memref<8x1xf32, #tpu.memory_space<vmem>>, vector<8x1xf32>
    %4 = vector.broadcast %3 : vector<8x1xf32> to vector<8x8xf32>
    %5 = arith.addf %2, %4 : vector<8x8xf32>
    %c0_5 = arith.constant 0 : index
    %c0_6 = arith.constant 0 : index
    %6 = vector.load %arg4[%c0_5, %c0_6] : memref<8x8xf32, #tpu.memory_space<vmem>>, vector<8x8xf32>
    tpu.vector_store %arg4[%c0_5, %c0_6], %5 {strides = array<i32>} : memref<8x8xf32, #tpu.memory_space<vmem>>, vector<8x8xf32>,
    return
  }
  func.func @transform_0(%arg0: i32) -> (i32, i32) {
    %c0_i32 = arith.constant 0 : i32
    %c0_i32_0 = arith.constant 0 : i32
    %c0_i32_1 = arith.constant 0 : i32
    return %c0_i32, %c0_i32_0 : i32, i32
  }
  func.func @transform_1(%arg0: i32) -> (i32, i32) {
    %c0_i32 = arith.constant 0 : i32
    %c0_i32_0 = arith.constant 0 : i32
    %c0_i32_1 = arith.constant 0 : i32
    return %c0_i32, %c0_i32_0 : i32, i32
  }
  func.func @transform_2(%arg0: i32) -> (i32, i32) {
    %c0_i32 = arith.constant 0 : i32
    %c0_i32_0 = arith.constant 0 : i32
    return %c0_i32, %arg0 : i32, i32
  }
  func.func @transform_3(%arg0: i32) -> (i32, i32) {
    %c0_i32 = arith.constant 0 : i32
    %c0_i32_0 = arith.constant 0 : i32
    return %c0_i32, %arg0 : i32, i32
  }
}

</mosaic_0001>

<llo_original>
// kernel: dlinear_forward_shared.1
$region0: #{dlinear_forward_shared.1}
  #allocation0 [shape = 'u32[]', space=smem, size = 0x4, offset = 0x4, fixed_abs, tag = 'smem constant byte address 0x4 - core index']
  #allocation1 [shape = 'u32[144,128]{1,0:T(1,128)}', space=vmem, size = 0x12000, scoped, tag = 'internal scratch']
  %s0 = inlined_call_operand.vmem [shape: f32[8,16], index: 0, kind: input, shape index: {}]
  %s1 = inlined_call_operand.vmem [shape: f32[8,1], index: 1, kind: input, shape index: {}]
  %s2 = inlined_call_operand.vmem [shape: f32[16,8], index: 2, kind: input, shape index: {}]
  %s3 = inlined_call_operand.vmem [shape: f32[8,8], index: 3, kind: output, shape index: {}]
  %s4 = sld [smem:[#allocation0]]
  $region22: #{dlinear_forward_shared.1} parent=0
    _
  %s6 = ssub.s32 1, %s4
  %s7 = scalar_select 0, %s6, %s4
  // Predicated region
  $region2: #{dlinear_forward_shared.1} parent=0 // pred_check
    _
  $region3: #{dlinear_forward_shared.1} parent=0 // pred_check_branch
    %9 = sbr.rel (0) target = $region5
  $region4: #{dlinear_forward_shared.1} parent=0 // pred_region
    _
  $region5: #{dlinear_forward_shared.1} parent=0 // pred_fallthru
    _
  // Predicated region
  $region6: #{dlinear_forward_shared.1} parent=0 // pred_check
    _
  $region7: #{dlinear_forward_shared.1} parent=0 // pred_check_branch
    %11 = sbr.rel (0) target = $region9
  $region8: #{dlinear_forward_shared.1} parent=0 // pred_region
    _
  $region9: #{dlinear_forward_shared.1} parent=0 // pred_fallthru
    _
  // Predicated region
  $region10: #{dlinear_forward_shared.1} parent=0 // pred_check
    _
  $region11: #{dlinear_forward_shared.1} parent=0 // pred_check_branch
    %13 = sbr.rel (0) target = $region13
  $region12: #{dlinear_forward_shared.1} parent=0 // pred_region
    _
  $region13: #{dlinear_forward_shared.1} parent=0 // pred_fallthru
    _
  %v14 = vld [vmem:[%s0] sm:$0xff]
  %v15 = vld [vmem:[%s2] sm:$0xff]
  %v16 = vld [vmem:[%s2 + $0x8] sm:$0xff]
  %v17 = vld [vmem:[%s1] sm:$0xff]
  %19 = vset.pattern.permute.xlu0 0
  %20 = vperm.xlu0 %19, %v17
  %v21 = vpop.permute.xlu0 %20
  %vm23 = vcmask 130048
  %v25 = vsel %vm23, %v14, 0
  %27 = vmatprep.subr.mxu0 0.0
  %28 = vmatpush1.msra.mxu0 %v15
  %29 = vmatprep.subr.mxu0 0.0
  %30 = vmatpush1.msra.mxu0 %v16
  %31 = vmatprep.subr.mxu0 0.0
  %32 = vmatpush1.msra.mxu0 0.0
  %33 = vmatprep.subr.mxu0 0.0
  %34 = vmatpush1.msra.mxu0 0.0
  %35 = vmatprep.subr.mxu0 0.0
  %36 = vmatpush1.msra.mxu0 0.0
  %37 = vmatprep.subr.mxu0 0.0
  %38 = vmatpush1.msra.mxu0 0.0
  %39 = vmatprep.subr.mxu0 0.0
  %40 = vmatpush1.msra.mxu0 0.0
  %41 = vmatprep.subr.mxu0 0.0
  %42 = vmatpush1.msra.mxu0 0.0
  %43 = vmatprep.subr.mxu0 0.0
  %44 = vmatpush1.msra.mxu0 0.0
  %45 = vmatprep.subr.mxu0 0.0
  %46 = vmatpush1.msra.mxu0 0.0
  %47 = vmatprep.subr.mxu0 0.0
  %48 = vmatpush1.msra.mxu0 0.0
  %49 = vmatprep.subr.mxu0 0.0
  %50 = vmatpush1.msra.mxu0 0.0
  %51 = vmatprep.subr.mxu0 0.0
  %52 = vmatpush1.msra.mxu0 0.0
  %53 = vmatprep.subr.mxu0 0.0
  %54 = vmatpush1.msra.mxu0 0.0
  %55 = vmatprep.subr.mxu0 0.0
  %56 = vmatpush1.msra.mxu0 0.0
  %57 = vmatprep.subr.mxu0 0.0
  %58 = vmatpush1.msra.mxu0 0.0
  %59 = vmatprep.subr.mxu0 0.0
  %60 = vmatpush1.msra.mxu0 0.0
  %61 = vmatprep.subr.mxu0 0.0
  %62 = vmatpush1.msra.mxu0 0.0
  %63 = vmatprep.subr.mxu0 0.0
  %64 = vmatpush1.msra.mxu0 0.0
  %65 = vmatprep.subr.mxu0 0.0
  %66 = vmatpush1.msra.mxu0 0.0
  %67 = vmatprep.subr.mxu0 0.0
  %68 = vmatpush1.msra.mxu0 0.0
  %69 = vmatprep.subr.mxu0 0.0
  %70 = vmatpush1.msra.mxu0 0.0
  %71 = vmatprep.subr.mxu0 0.0
  %72 = vmatpush1.msra.mxu0 0.0
  %73 = vmatprep.subr.mxu0 0.0
  %74 = vmatpush1.msra.mxu0 0.0
  %75 = vmatprep.subr.mxu0 0.0
  %76 = vmatpush1.msra.mxu0 0.0
  %77 = vmatprep.subr.mxu0 0.0
  %78 = vmatpush1.msra.mxu0 0.0
  %79 = vmatprep.subr.mxu0 0.0
  %80 = vmatpush1.msra.mxu0 0.0
  %81 = vmatprep.subr.mxu0 0.0
  %82 = vmatpush1.msra.mxu0 0.0
  %83 = vmatprep.subr.mxu0 0.0
  %84 = vmatpush1.msra.mxu0 0.0
  %85 = vmatprep.subr.mxu0 0.0
  %86 = vmatpush1.msra.mxu0 0.0
  %87 = vmatprep.subr.mxu0 0.0
  %88 = vmatpush1.msra.mxu0 0.0
  %89 = vmatprep.subr.mxu0 0.0
  %90 = vmatpush1.msra.mxu0 0.0
  %91 = vmatprep.mubr.f32.mxu0 0.0
  %92 = vmatmul.mubr.f32.gmra.mrb[0].mxu0 %v25
  %v93 = vpop.f32.mrb[0].mxu0
  %v94 = vadd.f32 %v21, %v93
  %v95 = vpop.f32.mrb[0].mxu0
  %96 = vdwg.mxu0
  %vm97 = vcmask 64512
  %98 = vst.msk [vmem:[%s3] sm:$0xff] %vm97, %v94
  // Predicated region
  $region14: #{dlinear_forward_shared.1} parent=0 // pred_check
    _
  $region15: #{dlinear_forward_shared.1} parent=0 // pred_check_branch
    %100 = sbr.rel (0) target = $region17
  $region16: #{dlinear_forward_shared.1} parent=0 // pred_region
    _
  $region17: #{dlinear_forward_shared.1} parent=0 // pred_fallthru
    _
  // Predicated region
  $region18: #{dlinear_forward_shared.1} parent=0 // pred_check
    _
  $region19: #{dlinear_forward_shared.1} parent=0 // pred_check_branch
    %102 = sbr.rel (0) target = $region21
  $region20: #{dlinear_forward_shared.1} parent=0 // pred_region
    _
  $region21: #{dlinear_forward_shared.1} parent=0 // pred_fallthru
    _

</llo_original>
